<compile_context>
chip_gen: v6e
topology: v6e:2x2x1
jax: 0.10.0
libtpu: 0.0.40
codegen_flags: <defaults>
</compile_context>

<pallas_src>
import functools

import numpy as np
import jax
import jax.numpy as jnp
from jax.experimental import pallas as pl
from jax.experimental.pallas import tpu as pltpu


# ----------------------------- Pallas kernel --------------------------------

def _block(h, w, aux, eps=1e-5):
    """Linear (bf16 @ MXU, f32 acc) -> ReLU -> LayerNorm. aux rows: [bias; gamma; beta]."""
    z = jnp.dot(h.astype(jnp.bfloat16), w, preferred_element_type=jnp.float32) + aux[0:1]
    z = jnp.maximum(z, 0.0)
    mu = jnp.mean(z, axis=-1, keepdims=True)
    var = jnp.mean(jnp.square(z - mu), axis=-1, keepdims=True)
    z = (z - mu) * jax.lax.rsqrt(var + eps)
    return z * aux[1:2] + aux[2:3]


def _critic_kernel(x_ref,
                   q1_w1, q1_w2, q1_w3, q1_aux1, q1_aux2, q1_aux3,
                   q2_w1, q2_w2, q2_w3, q2_aux1, q2_aux2, q2_aux3,
                   out_ref):
    """Fused forward of both Q-networks for one batch tile. Output (2, tile_b)."""
    x = x_ref[...]  # bf16 (tile_b, Do+Da)

    def qnet(w1, w2, w3, aux1, aux2, aux3_ref):
        aux3 = aux3_ref[...]  # (5, H3): bias3, gamma3, beta3, w4, [b4, 0, ...]
        h = _block(x, w1[...], aux1[...])
        # Dropout(0.1): eval-mode identity.
        h = _block(h, w2[...], aux2[...])
        h = _block(h, w3[...], aux3[0:3])
        # Final Linear(H3 -> 1): VPU multiply + lane reduction (no N=1 MXU matmul).
        q = jnp.sum(h * aux3[3:4], axis=-1)[None, :] + aux3[4:5, 0:1]   # (1, tile_b)
        return q

    q1 = qnet(q1_w1, q1_w2, q1_w3, q1_aux1, q1_aux2, q1_aux3)
    q2 = qnet(q2_w1, q2_w2, q2_w3, q2_aux1, q2_aux2, q2_aux3)
    # Lane-dense store: (2, tile_b) slab, row 0 = Q1, row 1 = Q2.
    out_ref[...] = jnp.concatenate([q1, q2], axis=0).astype(out_ref.dtype)


# ----------------------------- Kernel launcher -------------------------------

def _round_up(x, m):
    return ((x + m - 1) // m) * m


def _tpu_tile_defaults():
    """Chip-aware tiling defaults (safe fallbacks if detection fails)."""
    try:
        kind = jax.devices()[0].device_kind.lower()
    except Exception:  # pragma: no cover - defensive
        kind = ""
    older_mxu = any(f"v{n}" in kind for n in (2, 3, 4, 5))   # 128-wide MXU generations
    dual_core = "v7" in kind                                  # v7x: 2 TensorCores / chip
    align = 128 if older_mxu else 256
    max_tile_b = 512 if older_mxu else 1024                   # v5e scoped VMEM is 16 MiB
    return dict(align=align, max_tile_b=max_tile_b, dual_core=dual_core)


def _choose_tile_b(B, *, align, max_tile_b, dual_core):
    """Big MXU-aligned tiles on single-TC chips; >= 2 grid steps on v7x when B > 128."""
    b8 = _round_up(B, 8)
    if dual_core and B > 128:
        tile = _round_up(pl.cdiv(b8, 2), 128)     # split batch across the two TCs
    elif b8 > align:
        tile = _round_up(b8, align)               # fully-populated MXU passes
    else:
        tile = b8                                 # small batch: single full-array tile
    return min(tile, max_tile_b)


def _critic_forward(obs, act, q1_params, q2_params, *, align, max_tile_b, dual_core):
    """Fused forward of both Q-networks; returns (q1, q2), each [B, 1] float32."""
    B = obs.shape[0]
    x = jnp.concatenate([obs, act], axis=-1).astype(jnp.bfloat16)   # (B, Do+Da), bf16 stream
    d_in = x.shape[1]

    tile_b = _choose_tile_b(B, align=align, max_tile_b=max_tile_b, dual_core=dual_core)
    b_pad = _round_up(B, tile_b)
    if b_pad != B:
        x = jnp.pad(x, ((0, b_pad - B), (0, 0)))   # zero rows stay finite through LN
    num_tiles = b_pad // tile_b

    params = tuple(q1_params) + tuple(q2_params)
    in_specs = [pl.BlockSpec((tile_b, d_in), lambda i: (i, 0))] \
             + [pl.BlockSpec(p.shape, lambda i: (0, 0)) for p in params]   # VMEM-resident
    out_spec = pl.BlockSpec((2, tile_b), lambda i: (0, i))                 # lane-dense slab

    out = pl.pallas_call(
        _critic_kernel,
        out_shape=jax.ShapeDtypeStruct((2, b_pad), jnp.float32),
        grid=(num_tiles,),
        in_specs=in_specs,
        out_specs=out_spec,
        compiler_params=pltpu.CompilerParams(
            dimension_semantics=("parallel",)),
    )(x, *params)

    q1 = out[0, :B].reshape(B, 1)
    q2 = out[1, :B].reshape(B, 1)
    return q1, q2


# ----------------------------- Parameter init -------------------------------

def init_qnet_params(key, obs_dim, act_dim, hidden_dims):
    """Packed params for one Q-network.

    Returns (W1, W2, W3, aux1, aux2, aux3) where Wk are bf16 [in, out] matmul weights and
    auxk are f32 [3, Hk] = [bias; gamma; beta]; aux3 carries two extra rows: the final
    Linear(H3 -> 1) weight row and its bias (at column 0).
    """
    assert len(hidden_dims) == 3, "kernel is specialized for 3 hidden layers"
    gain = float(np.sqrt(2.0))
    h1, h2, h3 = hidden_dims
    d_in = obs_dim + act_dim
    keys = jax.random.split(key, 4)

    def ortho(k, out_d, in_d):
        w = jax.nn.initializers.orthogonal(scale=gain)(k, (out_d, in_d), jnp.float32)
        return w.T  # stored [in, out] for h @ W

    w1 = ortho(keys[0], h1, d_in).astype(jnp.bfloat16)
    w2 = ortho(keys[1], h2, h1).astype(jnp.bfloat16)
    w3 = ortho(keys[2], h3, h2).astype(jnp.bfloat16)
    w4 = jax.nn.initializers.orthogonal(scale=gain)(keys[3], (1, h3), jnp.float32)

    def aux(h):   # Linear bias = 0, LayerNorm weight = 1, LayerNorm bias = 0
        return jnp.stack([jnp.zeros((h,), jnp.float32),
                          jnp.ones((h,), jnp.float32),
                          jnp.zeros((h,), jnp.float32)], axis=0)

    aux1 = aux(h1)
    aux2 = aux(h2)
    aux3 = jnp.concatenate([aux(h3), w4, jnp.zeros((1, h3), jnp.float32)], axis=0)  # (5, H3)
    return (w1, w2, w3, aux1, aux2, aux3)


# ----------------------------- SACCritic wrapper ----------------------------

class SACCriticPallas:
    """Pallas-TPU forward pass of SACCritic (two Q-networks, eval mode)."""

    def __init__(self, observation_dim, action_dim, hidden_dims=(512, 512, 256), seed=0):
        k1, k2 = jax.random.split(jax.random.PRNGKey(seed))
        self.q1_params = init_qnet_params(k1, observation_dim, action_dim, list(hidden_dims))
        self.q2_params = init_qnet_params(k2, observation_dim, action_dim, list(hidden_dims))
        # End-to-end jit: pad + pallas_call + slice/reshape fuse into one dispatch.
        self._forward = jax.jit(
            functools.partial(_critic_forward, **_tpu_tile_defaults()))

    def __call__(self, observations, actions):
        return self._forward(observations, actions, self.q1_params, self.q2_params)

    def q1(self, observations, actions):
        # Both nets are fused into one call; Q2 comes essentially for free.
        q1, _ = self(observations, actions)
        return q1


# ----------------------------- Pure-JAX reference ---------------------------

def _ref_qnet(obs, act, params):
    """Pure-JAX reference with the same bf16-at-the-dot math as the kernel."""
    w1, w2, w3, aux1, aux2, aux3 = params
    x = jnp.concatenate([obs, act], axis=-1)

    def block(h, w, aux):
        z = jnp.dot(h.astype(jnp.bfloat16), w, preferred_element_type=jnp.float32) + aux[0:1]
        z = jnp.maximum(z, 0.0)
        mu = jnp.mean(z, axis=-1, keepdims=True)
        var = jnp.mean((z - mu) ** 2, axis=-1, keepdims=True)
        return (z - mu) / jnp.sqrt(var + 1e-5) * aux[1:2] + aux[2:3]

    h = block(x.astype(jnp.bfloat16), w1, aux1)
    h = block(h, w2, aux2)
    h = block(h, w3, aux3[0:3])
    return jnp.sum(h * aux3[3:4], axis=-1, keepdims=True) + aux3[4, 0]


# --------------------------------- main --------------------------------------

if __name__ == "__main__":
    key = jax.random.PRNGKey(0)
    k_obs, k_act = jax.random.split(key)

    batch, obs_dim, act_dim = 8, 12, 4
    observations = jax.random.normal(k_obs, (batch, obs_dim), jnp.float32)
    actions = jax.random.normal(k_act, (batch, act_dim), jnp.float32)

    critic = SACCriticPallas(obs_dim, act_dim, hidden_dims=(128, 128, 64), seed=0)

    q1, q2 = critic(observations, actions)
    q1 = jax.block_until_ready(q1)
    q2 = jax.block_until_ready(q2)

    # correctness check vs pure-JAX reference (same precision recipe)
    q1_ref = _ref_qnet(observations, actions, critic.q1_params)
    q2_ref = _ref_qnet(observations, actions, critic.q2_params)
    assert q1.shape == (batch, 1) and q2.shape == (batch, 1)
    np.testing.assert_allclose(np.asarray(q1), np.asarray(q1_ref), atol=1e-3, rtol=1e-3)
    np.testing.assert_allclose(np.asarray(q2), np.asarray(q2_ref), atol=1e-3, rtol=1e-3)

    print("KERNEL_OK")
</pallas_src>

<mosaic_0001>
module attributes {stable_mosaic.version = 11 : i64} {
  func.func @_critic_kernel(%arg0: i32, %arg1: memref<8x16xbf16, #tpu.memory_space<vmem>>, %arg2: memref<16x128xbf16, #tpu.memory_space<vmem>>, %arg3: memref<128x128xbf16, #tpu.memory_space<vmem>>, %arg4: memref<128x64xbf16, #tpu.memory_space<vmem>>, %arg5: memref<3x128xf32, #tpu.memory_space<vmem>>, %arg6: memref<3x128xf32, #tpu.memory_space<vmem>>, %arg7: memref<5x64xf32, #tpu.memory_space<vmem>>, %arg8: memref<16x128xbf16, #tpu.memory_space<vmem>>, %arg9: memref<128x128xbf16, #tpu.memory_space<vmem>>, %arg10: memref<128x64xbf16, #tpu.memory_space<vmem>>, %arg11: memref<3x128xf32, #tpu.memory_space<vmem>>, %arg12: memref<3x128xf32, #tpu.memory_space<vmem>>, %arg13: memref<5x64xf32, #tpu.memory_space<vmem>>, %arg14: memref<2x8xf32, #tpu.memory_space<vmem>>) attributes {dimension_semantics = [#tpu.dimension_semantics<parallel>], iteration_bounds = array<i64: 1>, scalar_prefetch = 0 : i64, scratch_operands = 0 : i64, tpu.core_type = #tpu.core_type<tc>, window_params = [{transform_indices = @transform_0, window_bounds = array<i64: 8, 16>}, {pipeline_mode = #tpu.pipeline_mode<synchronous>, transform_indices = @transform_1, window_bounds = array<i64: 16, 128>}, {pipeline_mode = #tpu.pipeline_mode<synchronous>, transform_indices = @transform_2, window_bounds = array<i64: 128, 128>}, {pipeline_mode = #tpu.pipeline_mode<synchronous>, transform_indices = @transform_3, window_bounds = array<i64: 128, 64>}, {pipeline_mode = #tpu.pipeline_mode<synchronous>, transform_indices = @transform_4, window_bounds = array<i64: 3, 128>}, {pipeline_mode = #tpu.pipeline_mode<synchronous>, transform_indices = @transform_5, window_bounds = array<i64: 3, 128>}, {pipeline_mode = #tpu.pipeline_mode<synchronous>, transform_indices = @transform_6, window_bounds = array<i64: 5, 64>}, {pipeline_mode = #tpu.pipeline_mode<synchronous>, transform_indices = @transform_7, window_bounds = array<i64: 16, 128>}, {pipeline_mode = #tpu.pipeline_mode<synchronous>, transform_indices = @transform_8, window_bounds = array<i64: 128, 128>}, {pipeline_mode = #tpu.pipeline_mode<synchronous>, transform_indices = @transform_9, window_bounds = array<i64: 128, 64>}, {pipeline_mode = #tpu.pipeline_mode<synchronous>, transform_indices = @transform_10, window_bounds = array<i64: 3, 128>}, {pipeline_mode = #tpu.pipeline_mode<synchronous>, transform_indices = @transform_11, window_bounds = array<i64: 3, 128>}, {pipeline_mode = #tpu.pipeline_mode<synchronous>, transform_indices = @transform_12, window_bounds = array<i64: 5, 64>}, {transform_indices = @transform_13, window_bounds = array<i64: 2, 8>}]} {
    %c0 = arith.constant 0 : index
    %c0_0 = arith.constant 0 : index
    %0 = vector.load %arg1[%c0, %c0_0] : memref<8x16xbf16, #tpu.memory_space<vmem>>, vector<8x16xbf16>
    %c0_1 = arith.constant 0 : index
    %c0_2 = arith.constant 0 : index
    %1 = vector.load %arg7[%c0_1, %c0_2] : memref<5x64xf32, #tpu.memory_space<vmem>>, vector<5x64xf32>
    %c0_3 = arith.constant 0 : index
    %c0_4 = arith.constant 0 : index
    %2 = vector.load %arg2[%c0_3, %c0_4] : memref<16x128xbf16, #tpu.memory_space<vmem>>, vector<16x128xbf16>
    %c0_5 = arith.constant 0 : index
    %c0_6 = arith.constant 0 : index
    %3 = vector.load %arg5[%c0_5, %c0_6] : memref<3x128xf32, #tpu.memory_space<vmem>>, vector<3x128xf32>
    %cst = arith.constant dense<0.000000e+00> : vector<8x128xf32>
    %4 = tpu.matmul %0, %2, %cst {dimension_numbers = #tpu.dot_dimension_numbers<[1], [0], [0], [1], [0, 0, 1, 1], [], []>} : vector<8x16xbf16>, vector<16x128xbf16>, vector<8x128xf32> -> vector<8x128xf32>
    %5 = vector.extract_strided_slice %3 {offsets = [0, 0], sizes = [1, 128], strides = [1, 1]} : vector<3x128xf32> to vector<1x128xf32>
    %6 = vector.broadcast %5 : vector<1x128xf32> to vector<8x128xf32>
    %7 = arith.addf %4, %6 : vector<8x128xf32>
    %cst_7 = arith.constant 0.000000e+00 : f32
    %8 = vector.broadcast %cst_7 : f32 to vector<8x128xf32>
    %9 = arith.maximumf %7, %8 : vector<8x128xf32>
    %cst_8 = arith.constant dense<0.000000e+00> : vector<8xf32>
    %10 = vector.multi_reduction <add>, %9, %cst_8 [1] : vector<8x128xf32> to vector<8xf32>
    %11 = vector.shape_cast %10 : vector<8xf32> to vector<8x1xf32>
    %cst_9 = arith.constant 1.280000e+02 : f32
    %12 = vector.broadcast %cst_9 : f32 to vector<8x1xf32>
    %13 = arith.divf %11, %12 : vector<8x1xf32>
    %14 = vector.broadcast %13 : vector<8x1xf32> to vector<8x128xf32>
    %15 = arith.subf %9, %14 : vector<8x128xf32>
    %16 = arith.mulf %15, %15 : vector<8x128xf32>
    %cst_10 = arith.constant dense<0.000000e+00> : vector<8xf32>
    %17 = vector.multi_reduction <add>, %16, %cst_10 [1] : vector<8x128xf32> to vector<8xf32>
    %18 = vector.shape_cast %17 : vector<8xf32> to vector<8x1xf32>
    %cst_11 = arith.constant 1.280000e+02 : f32
    %19 = vector.broadcast %cst_11 : f32 to vector<8x1xf32>
    %20 = arith.divf %18, %19 : vector<8x1xf32>
    %21 = vector.broadcast %13 : vector<8x1xf32> to vector<8x128xf32>
    %22 = arith.subf %9, %21 : vector<8x128xf32>
    %cst_12 = arith.constant 9.99999974E-6 : f32
    %23 = vector.broadcast %cst_12 : f32 to vector<8x1xf32>
    %24 = arith.addf %20, %23 : vector<8x1xf32>
    %25 = math.rsqrt %24 : vector<8x1xf32>
    %26 = vector.broadcast %25 : vector<8x1xf32> to vector<8x128xf32>
    %27 = arith.mulf %22, %26 : vector<8x128xf32>
    %28 = vector.extract_strided_slice %3 {offsets = [1, 0], sizes = [1, 128], strides = [1, 1]} : vector<3x128xf32> to vector<1x128xf32>
    %29 = vector.broadcast %28 : vector<1x128xf32> to vector<8x128xf32>
    %30 = arith.mulf %27, %29 : vector<8x128xf32>
    %31 = vector.extract_strided_slice %3 {offsets = [2, 0], sizes = [1, 128], strides = [1, 1]} : vector<3x128xf32> to vector<1x128xf32>
    %32 = vector.broadcast %31 : vector<1x128xf32> to vector<8x128xf32>
    %33 = arith.addf %30, %32 : vector<8x128xf32>
    %c0_13 = arith.constant 0 : index
    %c0_14 = arith.constant 0 : index
    %34 = vector.load %arg3[%c0_13, %c0_14] : memref<128x128xbf16, #tpu.memory_space<vmem>>, vector<128x128xbf16>
    %c0_15 = arith.constant 0 : index
    %c0_16 = arith.constant 0 : index
    %35 = vector.load %arg6[%c0_15, %c0_16] : memref<3x128xf32, #tpu.memory_space<vmem>>, vector<3x128xf32>
    %36 = arith.truncf %33 : vector<8x128xf32> to vector<8x128xbf16>
    %cst_17 = arith.constant dense<0.000000e+00> : vector<8x128xf32>
    %37 = tpu.matmul %36, %34, %cst_17 {dimension_numbers = #tpu.dot_dimension_numbers<[1], [0], [0], [1], [0, 0, 1, 1], [], []>} : vector<8x128xbf16>, vector<128x128xbf16>, vector<8x128xf32> -> vector<8x128xf32>
    %38 = vector.extract_strided_slice %35 {offsets = [0, 0], sizes = [1, 128], strides = [1, 1]} : vector<3x128xf32> to vector<1x128xf32>
    %39 = vector.broadcast %38 : vector<1x128xf32> to vector<8x128xf32>
    %40 = arith.addf %37, %39 : vector<8x128xf32>
    %cst_18 = arith.constant 0.000000e+00 : f32
    %41 = vector.broadcast %cst_18 : f32 to vector<8x128xf32>
    %42 = arith.maximumf %40, %41 : vector<8x128xf32>
    %cst_19 = arith.constant dense<0.000000e+00> : vector<8xf32>
    %43 = vector.multi_reduction <add>, %42, %cst_19 [1] : vector<8x128xf32> to vector<8xf32>
    %44 = vector.shape_cast %43 : vector<8xf32> to vector<8x1xf32>
    %cst_20 = arith.constant 1.280000e+02 : f32
    %45 = vector.broadcast %cst_20 : f32 to vector<8x1xf32>
    %46 = arith.divf %44, %45 : vector<8x1xf32>
    %47 = vector.broadcast %46 : vector<8x1xf32> to vector<8x128xf32>
    %48 = arith.subf %42, %47 : vector<8x128xf32>
    %49 = arith.mulf %48, %48 : vector<8x128xf32>
    %cst_21 = arith.constant dense<0.000000e+00> : vector<8xf32>
    %50 = vector.multi_reduction <add>, %49, %cst_21 [1] : vector<8x128xf32> to vector<8xf32>
    %51 = vector.shape_cast %50 : vector<8xf32> to vector<8x1xf32>
    %cst_22 = arith.constant 1.280000e+02 : f32
    %52 = vector.broadcast %cst_22 : f32 to vector<8x1xf32>
    %53 = arith.divf %51, %52 : vector<8x1xf32>
    %54 = vector.broadcast %46 : vector<8x1xf32> to vector<8x128xf32>
    %55 = arith.subf %42, %54 : vector<8x128xf32>
    %cst_23 = arith.constant 9.99999974E-6 : f32
    %56 = vector.broadcast %cst_23 : f32 to vector<8x1xf32>
    %57 = arith.addf %53, %56 : vector<8x1xf32>
    %58 = math.rsqrt %57 : vector<8x1xf32>
    %59 = vector.broadcast %58 : vector<8x1xf32> to vector<8x128xf32>
    %60 = arith.mulf %55, %59 : vector<8x128xf32>
    %61 = vector.extract_strided_slice %35 {offsets = [1, 0], sizes = [1, 128], strides = [1, 1]} : vector<3x128xf32> to vector<1x128xf32>
    %62 = vector.broadcast %61 : vector<1x128xf32> to vector<8x128xf32>
    %63 = arith.mulf %60, %62 : vector<8x128xf32>
    %64 = vector.extract_strided_slice %35 {offsets = [2, 0], sizes = [1, 128], strides = [1, 1]} : vector<3x128xf32> to vector<1x128xf32>
    %65 = vector.broadcast %64 : vector<1x128xf32> to vector<8x128xf32>
    %66 = arith.addf %63, %65 : vector<8x128xf32>
    %c0_24 = arith.constant 0 : index
    %c0_25 = arith.constant 0 : index
    %67 = vector.load %arg4[%c0_24, %c0_25] : memref<128x64xbf16, #tpu.memory_space<vmem>>, vector<128x64xbf16>
    %68 = vector.extract_strided_slice %1 {offsets = [0, 0], sizes = [3, 64], strides = [1, 1]} : vector<5x64xf32> to vector<3x64xf32>
    %69 = arith.truncf %66 : vector<8x128xf32> to vector<8x128xbf16>
    %cst_26 = arith.constant dense<0.000000e+00> : vector<8x64xf32>
    %70 = tpu.matmul %69, %67, %cst_26 {dimension_numbers = #tpu.dot_dimension_numbers<[1], [0], [0], [1], [0, 0, 1, 1], [], []>} : vector<8x128xbf16>, vector<128x64xbf16>, vector<8x64xf32> -> vector<8x64xf32>
    %71 = vector.extract_strided_slice %68 {offsets = [0, 0], sizes = [1, 64], strides = [1, 1]} : vector<3x64xf32> to vector<1x64xf32>
    %72 = vector.broadcast %71 : vector<1x64xf32> to vector<8x64xf32>
    %73 = arith.addf %70, %72 : vector<8x64xf32>
    %cst_27 = arith.constant 0.000000e+00 : f32
    %74 = vector.broadcast %cst_27 : f32 to vector<8x64xf32>
    %75 = arith.maximumf %73, %74 : vector<8x64xf32>
    %cst_28 = arith.constant dense<0.000000e+00> : vector<8xf32>
    %76 = vector.multi_reduction <add>, %75, %cst_28 [1] : vector<8x64xf32> to vector<8xf32>
    %77 = vector.shape_cast %76 : vector<8xf32> to vector<8x1xf32>
    %cst_29 = arith.constant 6.400000e+01 : f32
    %78 = vector.broadcast %cst_29 : f32 to vector<8x1xf32>
    %79 = arith.divf %77, %78 : vector<8x1xf32>
    %80 = vector.broadcast %79 : vector<8x1xf32> to vector<8x64xf32>
    %81 = arith.subf %75, %80 : vector<8x64xf32>
    %82 = arith.mulf %81, %81 : vector<8x64xf32>
    %cst_30 = arith.constant dense<0.000000e+00> : vector<8xf32>
    %83 = vector.multi_reduction <add>, %82, %cst_30 [1] : vector<8x64xf32> to vector<8xf32>
    %84 = vector.shape_cast %83 : vector<8xf32> to vector<8x1xf32>
    %cst_31 = arith.constant 6.400000e+01 : f32
    %85 = vector.broadcast %cst_31 : f32 to vector<8x1xf32>
    %86 = arith.divf %84, %85 : vector<8x1xf32>
    %87 = vector.broadcast %79 : vector<8x1xf32> to vector<8x64xf32>
    %88 = arith.subf %75, %87 : vector<8x64xf32>
    %cst_32 = arith.constant 9.99999974E-6 : f32
    %89 = vector.broadcast %cst_32 : f32 to vector<8x1xf32>
    %90 = arith.addf %86, %89 : vector<8x1xf32>
    %91 = math.rsqrt %90 : vector<8x1xf32>
    %92 = vector.broadcast %91 : vector<8x1xf32> to vector<8x64xf32>
    %93 = arith.mulf %88, %92 : vector<8x64xf32>
    %94 = vector.extract_strided_slice %68 {offsets = [1, 0], sizes = [1, 64], strides = [1, 1]} : vector<3x64xf32> to vector<1x64xf32>
    %95 = vector.broadcast %94 : vector<1x64xf32> to vector<8x64xf32>
    %96 = arith.mulf %93, %95 : vector<8x64xf32>
    %97 = vector.extract_strided_slice %68 {offsets = [2, 0], sizes = [1, 64], strides = [1, 1]} : vector<3x64xf32> to vector<1x64xf32>
    %98 = vector.broadcast %97 : vector<1x64xf32> to vector<8x64xf32>
    %99 = arith.addf %96, %98 : vector<8x64xf32>
    %100 = vector.extract_strided_slice %1 {offsets = [3, 0], sizes = [1, 64], strides = [1, 1]} : vector<5x64xf32> to vector<1x64xf32>
    %101 = vector.broadcast %100 : vector<1x64xf32> to vector<8x64xf32>
    %102 = arith.mulf %99, %101 : vector<8x64xf32>
    %cst_33 = arith.constant dense<0.000000e+00> : vector<8xf32>
    %103 = vector.multi_reduction <add>, %102, %cst_33 [1] : vector<8x64xf32> to vector<8xf32>
    %104 = vector.shape_cast %103 : vector<8xf32> to vector<1x8xf32>
    %105 = vector.extract_strided_slice %1 {offsets = [4, 0], sizes = [1, 1], strides = [1, 1]} : vector<5x64xf32> to vector<1x1xf32>
    %106 = vector.broadcast %105 : vector<1x1xf32> to vector<1x8xf32>
    %107 = arith.addf %104, %106 : vector<1x8xf32>
    %c0_34 = arith.constant 0 : index
    %c0_35 = arith.constant 0 : index
    %108 = vector.load %arg13[%c0_34, %c0_35] : memref<5x64xf32, #tpu.memory_space<vmem>>, vector<5x64xf32>
    %c0_36 = arith.constant 0 : index
    %c0_37 = arith.constant 0 : index
    %109 = vector.load %arg8[%c0_36, %c0_37] : memref<16x128xbf16, #tpu.memory_space<vmem>>, vector<16x128xbf16>
    %c0_38 = arith.constant 0 : index
    %c0_39 = arith.constant 0 : index
    %110 = vector.load %arg11[%c0_38, %c0_39] : memref<3x128xf32, #tpu.memory_space<vmem>>, vector<3x128xf32>
    %cst_40 = arith.constant dense<0.000000e+00> : vector<8x128xf32>
    %111 = tpu.matmul %0, %109, %cst_40 {dimension_numbers = #tpu.dot_dimension_numbers<[1], [0], [0], [1], [0, 0, 1, 1], [], []>} : vector<8x16xbf16>, vector<16x128xbf16>, vector<8x128xf32> -> vector<8x128xf32>
    %112 = vector.extract_strided_slice %110 {offsets = [0, 0], sizes = [1, 128], strides = [1, 1]} : vector<3x128xf32> to vector<1x128xf32>
    %113 = vector.broadcast %112 : vector<1x128xf32> to vector<8x128xf32>
    %114 = arith.addf %111, %113 : vector<8x128xf32>
    %cst_41 = arith.constant 0.000000e+00 : f32
    %115 = vector.broadcast %cst_41 : f32 to vector<8x128xf32>
    %116 = arith.maximumf %114, %115 : vector<8x128xf32>
    %cst_42 = arith.constant dense<0.000000e+00> : vector<8xf32>
    %117 = vector.multi_reduction <add>, %116, %cst_42 [1] : vector<8x128xf32> to vector<8xf32>
    %118 = vector.shape_cast %117 : vector<8xf32> to vector<8x1xf32>
    %cst_43 = arith.constant 1.280000e+02 : f32
    %119 = vector.broadcast %cst_43 : f32 to vector<8x1xf32>
    %120 = arith.divf %118, %119 : vector<8x1xf32>
    %121 = vector.broadcast %120 : vector<8x1xf32> to vector<8x128xf32>
    %122 = arith.subf %116, %121 : vector<8x128xf32>
    %123 = arith.mulf %122, %122 : vector<8x128xf32>
    %cst_44 = arith.constant dense<0.000000e+00> : vector<8xf32>
    %124 = vector.multi_reduction <add>, %123, %cst_44 [1] : vector<8x128xf32> to vector<8xf32>
    %125 = vector.shape_cast %124 : vector<8xf32> to vector<8x1xf32>
    %cst_45 = arith.constant 1.280000e+02 : f32
    %126 = vector.broadcast %cst_45 : f32 to vector<8x1xf32>
    %127 = arith.divf %125, %126 : vector<8x1xf32>
    %128 = vector.broadcast %120 : vector<8x1xf32> to vector<8x128xf32>
    %129 = arith.subf %116, %128 : vector<8x128xf32>
    %cst_46 = arith.constant 9.99999974E-6 : f32
    %130 = vector.broadcast %cst_46 : f32 to vector<8x1xf32>
    %131 = arith.addf %127, %130 : vector<8x1xf32>
    %132 = math.rsqrt %131 : vector<8x1xf32>
    %133 = vector.broadcast %132 : vector<8x1xf32> to vector<8x128xf32>
    %134 = arith.mulf %129, %133 : vector<8x128xf32>
    %135 = vector.extract_strided_slice %110 {offsets = [1, 0], sizes = [1, 128], strides = [1, 1]} : vector<3x128xf32> to vector<1x128xf32>
    %136 = vector.broadcast %135 : vector<1x128xf32> to vector<8x128xf32>
    %137 = arith.mulf %134, %136 : vector<8x128xf32>
    %138 = vector.extract_strided_slice %110 {offsets = [2, 0], sizes = [1, 128], strides = [1, 1]} : vector<3x128xf32> to vector<1x128xf32>
    %139 = vector.broadcast %138 : vector<1x128xf32> to vector<8x128xf32>
    %140 = arith.addf %137, %139 : vector<8x128xf32>
    %c0_47 = arith.constant 0 : index
    %c0_48 = arith.constant 0 : index
    %141 = vector.load %arg9[%c0_47, %c0_48] : memref<128x128xbf16, #tpu.memory_space<vmem>>, vector<128x128xbf16>
    %c0_49 = arith.constant 0 : index
    %c0_50 = arith.constant 0 : index
    %142 = vector.load %arg12[%c0_49, %c0_50] : memref<3x128xf32, #tpu.memory_space<vmem>>, vector<3x128xf32>
    %143 = arith.truncf %140 : vector<8x128xf32> to vector<8x128xbf16>
    %cst_51 = arith.constant dense<0.000000e+00> : vector<8x128xf32>
    %144 = tpu.matmul %143, %141, %cst_51 {dimension_numbers = #tpu.dot_dimension_numbers<[1], [0], [0], [1], [0, 0, 1, 1], [], []>} : vector<8x128xbf16>, vector<128x128xbf16>, vector<8x128xf32> -> vector<8x128xf32>
    %145 = vector.extract_strided_slice %142 {offsets = [0, 0], sizes = [1, 128], strides = [1, 1]} : vector<3x128xf32> to vector<1x128xf32>
    %146 = vector.broadcast %145 : vector<1x128xf32> to vector<8x128xf32>
    %147 = arith.addf %144, %146 : vector<8x128xf32>
    %cst_52 = arith.constant 0.000000e+00 : f32
    %148 = vector.broadcast %cst_52 : f32 to vector<8x128xf32>
    %149 = arith.maximumf %147, %148 : vector<8x128xf32>
    %cst_53 = arith.constant dense<0.000000e+00> : vector<8xf32>
    %150 = vector.multi_reduction <add>, %149, %cst_53 [1] : vector<8x128xf32> to vector<8xf32>
    %151 = vector.shape_cast %150 : vector<8xf32> to vector<8x1xf32>
    %cst_54 = arith.constant 1.280000e+02 : f32
    %152 = vector.broadcast %cst_54 : f32 to vector<8x1xf32>
    %153 = arith.divf %151, %152 : vector<8x1xf32>
    %154 = vector.broadcast %153 : vector<8x1xf32> to vector<8x128xf32>
    %155 = arith.subf %149, %154 : vector<8x128xf32>
    %156 = arith.mulf %155, %155 : vector<8x128xf32>
    %cst_55 = arith.constant dense<0.000000e+00> : vector<8xf32>
    %157 = vector.multi_reduction <add>, %156, %cst_55 [1] : vector<8x128xf32> to vector<8xf32>
    %158 = vector.shape_cast %157 : vector<8xf32> to vector<8x1xf32>
    %cst_56 = arith.constant 1.280000e+02 : f32
    %159 = vector.broadcast %cst_56 : f32 to vector<8x1xf32>
    %160 = arith.divf %158, %159 : vector<8x1xf32>
    %161 = vector.broadcast %153 : vector<8x1xf32> to vector<8x128xf32>
    %162 = arith.subf %149, %161 : vector<8x128xf32>
    %cst_57 = arith.constant 9.99999974E-6 : f32
    %163 = vector.broadcast %cst_57 : f32 to vector<8x1xf32>
    %164 = arith.addf %160, %163 : vector<8x1xf32>
    %165 = math.rsqrt %164 : vector<8x1xf32>
    %166 = vector.broadcast %165 : vector<8x1xf32> to vector<8x128xf32>
    %167 = arith.mulf %162, %166 : vector<8x128xf32>
    %168 = vector.extract_strided_slice %142 {offsets = [1, 0], sizes = [1, 128], strides = [1, 1]} : vector<3x128xf32> to vector<1x128xf32>
    %169 = vector.broadcast %168 : vector<1x128xf32> to vector<8x128xf32>
    %170 = arith.mulf %167, %169 : vector<8x128xf32>
    %171 = vector.extract_strided_slice %142 {offsets = [2, 0], sizes = [1, 128], strides = [1, 1]} : vector<3x128xf32> to vector<1x128xf32>
    %172 = vector.broadcast %171 : vector<1x128xf32> to vector<8x128xf32>
    %173 = arith.addf %170, %172 : vector<8x128xf32>
    %c0_58 = arith.constant 0 : index
    %c0_59 = arith.constant 0 : index
    %174 = vector.load %arg10[%c0_58, %c0_59] : memref<128x64xbf16, #tpu.memory_space<vmem>>, vector<128x64xbf16>
    %175 = vector.extract_strided_slice %108 {offsets = [0, 0], sizes = [3, 64], strides = [1, 1]} : vector<5x64xf32> to vector<3x64xf32>
    %176 = arith.truncf %173 : vector<8x128xf32> to vector<8x128xbf16>
    %cst_60 = arith.constant dense<0.000000e+00> : vector<8x64xf32>
    %177 = tpu.matmul %176, %174, %cst_60 {dimension_numbers = #tpu.dot_dimension_numbers<[1], [0], [0], [1], [0, 0, 1, 1], [], []>} : vector<8x128xbf16>, vector<128x64xbf16>, vector<8x64xf32> -> vector<8x64xf32>
    %178 = vector.extract_strided_slice %175 {offsets = [0, 0], sizes = [1, 64], strides = [1, 1]} : vector<3x64xf32> to vector<1x64xf32>
    %179 = vector.broadcast %178 : vector<1x64xf32> to vector<8x64xf32>
    %180 = arith.addf %177, %179 : vector<8x64xf32>
    %cst_61 = arith.constant 0.000000e+00 : f32
    %181 = vector.broadcast %cst_61 : f32 to vector<8x64xf32>
    %182 = arith.maximumf %180, %181 : vector<8x64xf32>
    %cst_62 = arith.constant dense<0.000000e+00> : vector<8xf32>
    %183 = vector.multi_reduction <add>, %182, %cst_62 [1] : vector<8x64xf32> to vector<8xf32>
    %184 = vector.shape_cast %183 : vector<8xf32> to vector<8x1xf32>
    %cst_63 = arith.constant 6.400000e+01 : f32
    %185 = vector.broadcast %cst_63 : f32 to vector<8x1xf32>
    %186 = arith.divf %184, %185 : vector<8x1xf32>
    %187 = vector.broadcast %186 : vector<8x1xf32> to vector<8x64xf32>
    %188 = arith.subf %182, %187 : vector<8x64xf32>
    %189 = arith.mulf %188, %188 : vector<8x64xf32>
    %cst_64 = arith.constant dense<0.000000e+00> : vector<8xf32>
    %190 = vector.multi_reduction <add>, %189, %cst_64 [1] : vector<8x64xf32> to vector<8xf32>
    %191 = vector.shape_cast %190 : vector<8xf32> to vector<8x1xf32>
    %cst_65 = arith.constant 6.400000e+01 : f32
    %192 = vector.broadcast %cst_65 : f32 to vector<8x1xf32>
    %193 = arith.divf %191, %192 : vector<8x1xf32>
    %194 = vector.broadcast %186 : vector<8x1xf32> to vector<8x64xf32>
    %195 = arith.subf %182, %194 : vector<8x64xf32>
    %cst_66 = arith.constant 9.99999974E-6 : f32
    %196 = vector.broadcast %cst_66 : f32 to vector<8x1xf32>
    %197 = arith.addf %193, %196 : vector<8x1xf32>
    %198 = math.rsqrt %197 : vector<8x1xf32>
    %199 = vector.broadcast %198 : vector<8x1xf32> to vector<8x64xf32>
    %200 = arith.mulf %195, %199 : vector<8x64xf32>
    %201 = vector.extract_strided_slice %175 {offsets = [1, 0], sizes = [1, 64], strides = [1, 1]} : vector<3x64xf32> to vector<1x64xf32>
    %202 = vector.broadcast %201 : vector<1x64xf32> to vector<8x64xf32>
    %203 = arith.mulf %200, %202 : vector<8x64xf32>
    %204 = vector.extract_strided_slice %175 {offsets = [2, 0], sizes = [1, 64], strides = [1, 1]} : vector<3x64xf32> to vector<1x64xf32>
    %205 = vector.broadcast %204 : vector<1x64xf32> to vector<8x64xf32>
    %206 = arith.addf %203, %205 : vector<8x64xf32>
    %207 = vector.extract_strided_slice %108 {offsets = [3, 0], sizes = [1, 64], strides = [1, 1]} : vector<5x64xf32> to vector<1x64xf32>
    %208 = vector.broadcast %207 : vector<1x64xf32> to vector<8x64xf32>
    %209 = arith.mulf %206, %208 : vector<8x64xf32>
    %cst_67 = arith.constant dense<0.000000e+00> : vector<8xf32>
    %210 = vector.multi_reduction <add>, %209, %cst_67 [1] : vector<8x64xf32> to vector<8xf32>
    %211 = vector.shape_cast %210 : vector<8xf32> to vector<1x8xf32>
    %212 = vector.extract_strided_slice %108 {offsets = [4, 0], sizes = [1, 1], strides = [1, 1]} : vector<5x64xf32> to vector<1x1xf32>
    %213 = vector.broadcast %212 : vector<1x1xf32> to vector<1x8xf32>
    %214 = arith.addf %211, %213 : vector<1x8xf32>
    %215 = tpu.concatenate %107, %214 in 0 : vector<1x8xf32>, vector<1x8xf32> -> vector<2x8xf32>
    %c0_68 = arith.constant 0 : index
    %c0_69 = arith.constant 0 : index
    %216 = vector.load %arg14[%c0_68, %c0_69] : memref<2x8xf32, #tpu.memory_space<vmem>>, vector<2x8xf32>
    tpu.vector_store %arg14[%c0_68, %c0_69], %215 {strides = array<i32>} : memref<2x8xf32, #tpu.memory_space<vmem>>, vector<2x8xf32>,
    return
  }
  func.func @transform_0(%arg0: i32) -> (i32, i32) {
    %c0_i32 = arith.constant 0 : i32
    %c0_i32_0 = arith.constant 0 : i32
    return %arg0, %c0_i32 : i32, i32
  }
  func.func @transform_1(%arg0: i32) -> (i32, i32) {
    %c0_i32 = arith.constant 0 : i32
    %c0_i32_0 = arith.constant 0 : i32
    %c0_i32_1 = arith.constant 0 : i32
    return %c0_i32, %c0_i32_0 : i32, i32
  }
  func.func @transform_2(%arg0: i32) -> (i32, i32) {
    %c0_i32 = arith.constant 0 : i32
    %c0_i32_0 = arith.constant 0 : i32
    %c0_i32_1 = arith.constant 0 : i32
    return %c0_i32, %c0_i32_0 : i32, i32
  }
  func.func @transform_3(%arg0: i32) -> (i32, i32) {
    %c0_i32 = arith.constant 0 : i32
    %c0_i32_0 = arith.constant 0 : i32
    %c0_i32_1 = arith.constant 0 : i32
    return %c0_i32, %c0_i32_0 : i32, i32
  }
  func.func @transform_4(%arg0: i32) -> (i32, i32) {
    %c0_i32 = arith.constant 0 : i32
    %c0_i32_0 = arith.constant 0 : i32
    %c0_i32_1 = arith.constant 0 : i32
    return %c0_i32, %c0_i32_0 : i32, i32
  }
  func.func @transform_5(%arg0: i32) -> (i32, i32) {
    %c0_i32 = arith.constant 0 : i32
    %c0_i32_0 = arith.constant 0 : i32
    %c0_i32_1 = arith.constant 0 : i32
    return %c0_i32, %c0_i32_0 : i32, i32
  }
  func.func @transform_6(%arg0: i32) -> (i32, i32) {
    %c0_i32 = arith.constant 0 : i32
    %c0_i32_0 = arith.constant 0 : i32
    %c0_i32_1 = arith.constant 0 : i32
    return %c0_i32, %c0_i32_0 : i32, i32
  }
  func.func @transform_7(%arg0: i32) -> (i32, i32) {
    %c0_i32 = arith.constant 0 : i32
    %c0_i32_0 = arith.constant 0 : i32
    %c0_i32_1 = arith.constant 0 : i32
    return %c0_i32, %c0_i32_0 : i32, i32
  }
  func.func @transform_8(%arg0: i32) -> (i32, i32) {
    %c0_i32 = arith.constant 0 : i32
    %c0_i32_0 = arith.constant 0 : i32
    %c0_i32_1 = arith.constant 0 : i32
    return %c0_i32, %c0_i32_0 : i32, i32
  }
  func.func @transform_9(%arg0: i32) -> (i32, i32) {
    %c0_i32 = arith.constant 0 : i32
    %c0_i32_0 = arith.constant 0 : i32
    %c0_i32_1 = arith.constant 0 : i32
    return %c0_i32, %c0_i32_0 : i32, i32
  }
  func.func @transform_10(%arg0: i32) -> (i32, i32) {
    %c0_i32 = arith.constant 0 : i32
    %c0_i32_0 = arith.constant 0 : i32
    %c0_i32_1 = arith.constant 0 : i32
    return %c0_i32, %c0_i32_0 : i32, i32
  }
  func.func @transform_11(%arg0: i32) -> (i32, i32) {
    %c0_i32 = arith.constant 0 : i32
    %c0_i32_0 = arith.constant 0 : i32
    %c0_i32_1 = arith.constant 0 : i32
    return %c0_i32, %c0_i32_0 : i32, i32
  }
  func.func @transform_12(%arg0: i32) -> (i32, i32) {
    %c0_i32 = arith.constant 0 : i32
    %c0_i32_0 = arith.constant 0 : i32
    %c0_i32_1 = arith.constant 0 : i32
    return %c0_i32, %c0_i32_0 : i32, i32
  }
  func.func @transform_13(%arg0: i32) -> (i32, i32) {
    %c0_i32 = arith.constant 0 : i32
    %c0_i32_0 = arith.constant 0 : i32
    return %c0_i32, %arg0 : i32, i32
  }
}

</mosaic_0001>

<llo_original>
// kernel: _critic_forward.1
$region0: #{_critic_forward.1}
  #allocation0 [shape = 'u32[]', space=smem, size = 0x4, offset = 0x4, fixed_abs, tag = 'smem constant byte address 0x4 - core index']
  #allocation1 [shape = 'u32[144,128]{1,0:T(1,128)}', space=vmem, size = 0x12000, scoped, tag = 'internal scratch']
  %s0 = inlined_call_operand.vmem [shape: bf16[8,16], index: 0, kind: input, shape index: {}]
  %s1 = inlined_call_operand.vmem [shape: bf16[16,128], index: 1, kind: input, shape index: {}]
  %s2 = inlined_call_operand.vmem [shape: bf16[128,128], index: 2, kind: input, shape index: {}]
  %s3 = inlined_call_operand.vmem [shape: bf16[128,64], index: 3, kind: input, shape index: {}]
  %s4 = inlined_call_operand.vmem [shape: f32[3,128], index: 4, kind: input, shape index: {}]
  %s5 = inlined_call_operand.vmem [shape: f32[3,128], index: 5, kind: input, shape index: {}]
  %s6 = inlined_call_operand.vmem [shape: f32[5,64], index: 6, kind: input, shape index: {}]
  %s7 = inlined_call_operand.vmem [shape: bf16[16,128], index: 7, kind: input, shape index: {}]
  %s8 = inlined_call_operand.vmem [shape: bf16[128,128], index: 8, kind: input, shape index: {}]
  %s9 = inlined_call_operand.vmem [shape: bf16[128,64], index: 9, kind: input, shape index: {}]
  %s10 = inlined_call_operand.vmem [shape: f32[3,128], index: 10, kind: input, shape index: {}]
  %s11 = inlined_call_operand.vmem [shape: f32[3,128], index: 11, kind: input, shape index: {}]
  %s12 = inlined_call_operand.vmem [shape: f32[5,64], index: 12, kind: input, shape index: {}]
  %s13 = inlined_call_operand.vmem [shape: f32[2,8], index: 13, kind: output, shape index: {}]
  %s14 = sld [smem:[#allocation0]]
  $region62: #{_critic_forward.1} parent=0
    _
  %s16 = ssub.s32 1, %s14
  %s17 = scalar_select 0, %s16, %s14
  // Predicated region
  $region2: #{_critic_forward.1} parent=0 // pred_check
    _
  $region3: #{_critic_forward.1} parent=0 // pred_check_branch
    %19 = sbr.rel (0) target = $region5
  $region4: #{_critic_forward.1} parent=0 // pred_region
    _
  $region5: #{_critic_forward.1} parent=0 // pred_fallthru
    _
  // Predicated region
  $region6: #{_critic_forward.1} parent=0 // pred_check
    _
  $region7: #{_critic_forward.1} parent=0 // pred_check_branch
    %21 = sbr.rel (0) target = $region9
  $region8: #{_critic_forward.1} parent=0 // pred_region
    _
  $region9: #{_critic_forward.1} parent=0 // pred_fallthru
    _
  // Predicated region
  $region10: #{_critic_forward.1} parent=0 // pred_check
    _
  $region11: #{_critic_forward.1} parent=0 // pred_check_branch
    %23 = sbr.rel (0) target = $region13
  $region12: #{_critic_forward.1} parent=0 // pred_region
    _
  $region13: #{_critic_forward.1} parent=0 // pred_fallthru
    _
  // Predicated region
  $region14: #{_critic_forward.1} parent=0 // pred_check
    _
  $region15: #{_critic_forward.1} parent=0 // pred_check_branch
    %25 = sbr.rel (0) target = $region17
  $region16: #{_critic_forward.1} parent=0 // pred_region
    _
  $region17: #{_critic_forward.1} parent=0 // pred_fallthru
    _
  // Predicated region
  $region18: #{_critic_forward.1} parent=0 // pred_check
    _
  $region19: #{_critic_forward.1} parent=0 // pred_check_branch
    %27 = sbr.rel (0) target = $region21
  $region20: #{_critic_forward.1} parent=0 // pred_region
    _
  $region21: #{_critic_forward.1} parent=0 // pred_fallthru
    _
  // Predicated region
  $region22: #{_critic_forward.1} parent=0 // pred_check
    _
  $region23: #{_critic_forward.1} parent=0 // pred_check_branch
    %29 = sbr.rel (0) target = $region25
  $region24: #{_critic_forward.1} parent=0 // pred_region
    _
  $region25: #{_critic_forward.1} parent=0 // pred_fallthru
    _
  // Predicated region
  $region26: #{_critic_forward.1} parent=0 // pred_check
    _
  $region27: #{_critic_forward.1} parent=0 // pred_check_branch
    %31 = sbr.rel (0) target = $region29
  $region28: #{_critic_forward.1} parent=0 // pred_region
    _
  $region29: #{_critic_forward.1} parent=0 // pred_fallthru
    _
  // Predicated region
  $region30: #{_critic_forward.1} parent=0 // pred_check
    _
  $region31: #{_critic_forward.1} parent=0 // pred_check_branch
    %33 = sbr.rel (0) target = $region33
  $region32: #{_critic_forward.1} parent=0 // pred_region
    _
  $region33: #{_critic_forward.1} parent=0 // pred_fallthru
    _
  // Predicated region
  $region34: #{_critic_forward.1} parent=0 // pred_check
    _
  $region35: #{_critic_forward.1} parent=0 // pred_check_branch
    %35 = sbr.rel (0) target = $region37
  $region36: #{_critic_forward.1} parent=0 // pred_region
    _
  $region37: #{_critic_forward.1} parent=0 // pred_fallthru
    _
  // Predicated region
  $region38: #{_critic_forward.1} parent=0 // pred_check
    _
  $region39: #{_critic_forward.1} parent=0 // pred_check_branch
    %37 = sbr.rel (0) target = $region41
  $region40: #{_critic_forward.1} parent=0 // pred_region
    _
  $region41: #{_critic_forward.1} parent=0 // pred_fallthru
    _
  // Predicated region
  $region42: #{_critic_forward.1} parent=0 // pred_check
    _
  $region43: #{_critic_forward.1} parent=0 // pred_check_branch
    %39 = sbr.rel (0) target = $region45
  $region44: #{_critic_forward.1} parent=0 // pred_region
    _
  $region45: #{_critic_forward.1} parent=0 // pred_fallthru
    _
  // Predicated region
  $region46: #{_critic_forward.1} parent=0 // pred_check
    _
  $region47: #{_critic_forward.1} parent=0 // pred_check_branch
    %41 = sbr.rel (0) target = $region49
  $region48: #{_critic_forward.1} parent=0 // pred_region
    _
  $region49: #{_critic_forward.1} parent=0 // pred_fallthru
    _
  // Predicated region
  $region50: #{_critic_forward.1} parent=0 // pred_check
    _
  $region51: #{_critic_forward.1} parent=0 // pred_check_branch
    %43 = sbr.rel (0) target = $region53
  $region52: #{_critic_forward.1} parent=0 // pred_region
    _
  $region53: #{_critic_forward.1} parent=0 // pred_fallthru
    _
  %v45 = vld [vmem:[%s0] sm:$0xf]
  %v46 = vld [vmem:[%s6] sm:$0x1f]
  %v47 = vld [vmem:[%s1] sm:$0xf]
  %v48 = vld [vmem:[%s1 + $0x4] sm:$0xf]
  %v49 = vld [vmem:[%s4] sm:$0x7]
  %v50 = vlaneseq
  %v51 = vshrl.u32 %v50, 7
  %v52 = vsub.s32 0, %v51
  %v53 = vrot.slane %v49, %v52
  %v56 = vunpack.c.l.b16 %v47
  %v57 = vunpack.c.l.b16 %v48
  %v58 = vpack.c.b16 %v57, %v56
  %vm60 = vcmask 130048
  %v62 = vsel %vm60, %v45, 0
  %64 = vmatprep.subr.bf16.mxu0 0
  %65 = vmatpush1.bf16.msra.mxu0 0
  %66 = vmatprep.subr.bf16.mxu0 0
  %67 = vmatpush1.bf16.msra.mxu0 0
  %68 = vmatprep.subr.bf16.mxu0 0
  %69 = vmatpush1.bf16.msra.mxu0 0
  %70 = vmatprep.subr.bf16.mxu0 0
  %71 = vmatpush1.bf16.msra.mxu0 0
  %72 = vmatprep.subr.bf16.mxu0 0
  %73 = vmatpush1.bf16.msra.mxu0 0
  %74 = vmatprep.subr.bf16.mxu0 0
  %75 = vmatpush1.bf16.msra.mxu0 0
  %76 = vmatprep.subr.bf16.mxu0 0
  %77 = vmatpush1.bf16.msra.mxu0 0
  %78 = vmatprep.subr.bf16.mxu0 0
  %79 = vmatpush1.bf16.msra.mxu0 %v58
  %80 = vmatprep.subr.bf16.mxu0 0
  %81 = vmatpush2.bf16.msra.mxu0 0
  %82 = vmatprep.subr.bf16.mxu0 0
  %83 = vmatpush2.bf16.msra.mxu0 0
  %84 = vmatprep.subr.bf16.mxu0 0
  %85 = vmatpush2.bf16.msra.mxu0 0
  %86 = vmatprep.subr.bf16.mxu0 0
  %87 = vmatpush2.bf16.msra.mxu0 0
  %88 = vmatprep.subr.bf16.mxu0 0
  %89 = vmatpush2.bf16.msra.mxu0 0
  %90 = vmatprep.subr.bf16.mxu0 0
  %91 = vmatpush2.bf16.msra.mxu0 0
  %92 = vmatprep.subr.bf16.mxu0 0
  %93 = vmatpush2.bf16.msra.mxu0 0
  %94 = vmatprep.subr.bf16.mxu0 0
  %95 = vmatpush2.bf16.msra.mxu0 0
  %96 = vmatprep.mubr.bf16.mxu0 0
  %97 = vmatmul.mubr.bf16.gmra.mxu0 %v62
  %v98 = vpop.f32.mrf.mxu0
  %v99 = vadd.f32 %v53, %v98
  %v100 = vpop.f32.mrf.mxu0
  %v101 = vpop.f32.mrf.mxu0
  %v102 = vpop.f32.mrf.mxu0
  %103 = vdwg.mxu0
  %v104 = vmax.f32 %v99, 0.0
  %105 = vadd.xlane.f32.xlu0 %v104
  %v106 = vpop.xlane.xlu0 %105
  %v107 = vrcp.pop 128.0
  %v108 = vmul.f32 %v106, %v107
  %v109 = vsub.f32 %v104, %v108
  %v110 = vmul.f32 %v109, %v109
  %111 = vadd.xlane.f32.xlu0 %v110
  %v112 = vpop.xlane.xlu0 %111
  %v113 = vmul.f32 %v112, %v107
  %v114 = vadd.f32 %v113, 1e-05
  %v115 = vrsqrt.pop %v114
  %v116 = vmul.f32 %v109, %v115
  %v117 = vlaneseq
  %v118 = vshrl.u32 %v117, 7
  %v119 = vsub.s32 1, %v118
  %v120 = vrot.slane %v49, %v119
  %v121 = vmul.f32 %v116, %v120
  %v122 = vlaneseq
  %v123 = vshrl.u32 %v122, 7
  %v124 = vsub.s32 2, %v123
  %v125 = vrot.slane %v49, %v124
  %v126 = vadd.f32 %v121, %v125
  %v127 = vld [vmem:[%s2] sm:$0xf]
  %v128 = vld [vmem:[%s2 + $0x4] sm:$0xf]
  %v129 = vld [vmem:[%s2 + $0x8] sm:$0xf]
  %v130 = vld [vmem:[%s2 + $0xc] sm:$0xf]
  %v131 = vld [vmem:[%s2 + $0x10] sm:$0xf]
  %v132 = vld [vmem:[%s2 + $0x14] sm:$0xf]
  %v133 = vld [vmem:[%s2 + $0x18] sm:$0xf]
  %v134 = vld [vmem:[%s2 + $0x1c] sm:$0xf]
  %v135 = vld [vmem:[%s2 + $0x20] sm:$0xf]
  %v136 = vld [vmem:[%s2 + $0x24] sm:$0xf]
  %v137 = vld [vmem:[%s2 + $0x28] sm:$0xf]
  %v138 = vld [vmem:[%s2 + $0x2c] sm:$0xf]
  %v139 = vld [vmem:[%s2 + $0x30] sm:$0xf]
  %v140 = vld [vmem:[%s2 + $0x34] sm:$0xf]
  %v141 = vld [vmem:[%s2 + $0x38] sm:$0xf]
  %v142 = vld [vmem:[%s2 + $0x3c] sm:$0xf]
  %v143 = vld [vmem:[%s5] sm:$0x7]
  %v144 = vpack.c.bf16 %v126, %v126
  %v145 = vlaneseq
  %v146 = vshrl.u32 %v145, 7
  %v147 = vsub.s32 0, %v146
  %v148 = vrot.slane %v143, %v147
  %v165 = vunpack.c.l.b16 %v127
  %v166 = vunpack.c.l.b16 %v128
  %v167 = vunpack.c.l.b16 %v129
  %v168 = vunpack.c.l.b16 %v130
  %v169 = vunpack.c.l.b16 %v131
  %v170 = vunpack.c.l.b16 %v132
  %v171 = vunpack.c.l.b16 %v133
  %v172 = vunpack.c.l.b16 %v134
  %v173 = vunpack.c.l.b16 %v135
  %v174 = vunpack.c.l.b16 %v136
  %v175 = vunpack.c.l.b16 %v137
  %v176 = vunpack.c.l.b16 %v138
  %v177 = vunpack.c.l.b16 %v139
  %v178 = vunpack.c.l.b16 %v140
  %v179 = vunpack.c.l.b16 %v141
  %v180 = vunpack.c.l.b16 %v142
  %v181 = vpack.c.b16 %v166, %v165
  %v182 = vpack.c.b16 %v168, %v167
  %v183 = vpack.c.b16 %v170, %v169
  %v184 = vpack.c.b16 %v172, %v171
  %v185 = vpack.c.b16 %v174, %v173
  %v186 = vpack.c.b16 %v176, %v175
  %v187 = vpack.c.b16 %v178, %v177
  %v188 = vpack.c.b16 %v180, %v179
  %197 = vmatprep.subr.bf16.mxu0 0
  %198 = vmatpush1.bf16.msra.mxu0 %v188
  %199 = vmatprep.subr.bf16.mxu0 0
  %200 = vmatpush1.bf16.msra.mxu0 %v187
  %201 = vmatprep.subr.bf16.mxu0 0
  %202 = vmatpush1.bf16.msra.mxu0 %v186
  %203 = vmatprep.subr.bf16.mxu0 0
  %204 = vmatpush1.bf16.msra.mxu0 %v185
  %205 = vmatprep.subr.bf16.mxu0 0
  %206 = vmatpush1.bf16.msra.mxu0 %v184
  %207 = vmatprep.subr.bf16.mxu0 0
  %208 = vmatpush1.bf16.msra.mxu0 %v183
  %209 = vmatprep.subr.bf16.mxu0 0
  %210 = vmatpush1.bf16.msra.mxu0 %v182
  %211 = vmatprep.subr.bf16.mxu0 0
  %212 = vmatpush1.bf16.msra.mxu0 %v181
  %213 = vmatprep.subr.bf16.mxu0 0
  %214 = vmatpush2.bf16.msra.mxu0 0
  %215 = vmatprep.subr.bf16.mxu0 0
  %216 = vmatpush2.bf16.msra.mxu0 0
  %217 = vmatprep.subr.bf16.mxu0 0
  %218 = vmatpush2.bf16.msra.mxu0 0
  %219 = vmatprep.subr.bf16.mxu0 0
  %220 = vmatpush2.bf16.msra.mxu0 0
  %221 = vmatprep.subr.bf16.mxu0 0
  %222 = vmatpush2.bf16.msra.mxu0 0
  %223 = vmatprep.subr.bf16.mxu0 0
  %224 = vmatpush2.bf16.msra.mxu0 0
  %225 = vmatprep.subr.bf16.mxu0 0
  %226 = vmatpush2.bf16.msra.mxu0 0
  %227 = vmatprep.subr.bf16.mxu0 0
  %228 = vmatpush2.bf16.msra.mxu0 0
  %229 = vmatprep.mubr.bf16.mxu0 0
  %230 = vmatmul.mubr.bf16.gmra.mxu0 %v144
  %v231 = vpop.f32.mrf.mxu0
  %v232 = vadd.f32 %v148, %v231
  %v233 = vpop.f32.mrf.mxu0
  %v234 = vpop.f32.mrf.mxu0
  %v235 = vpop.f32.mrf.mxu0
  %236 = vdwg.mxu0
  %v237 = vmax.f32 %v232, 0.0
  %238 = vadd.xlane.f32.xlu0 %v237
  %v239 = vpop.xlane.xlu0 %238
  %v240 = vmul.f32 %v239, %v107
  %v241 = vsub.f32 %v237, %v240
  %v242 = vmul.f32 %v241, %v241
  %243 = vadd.xlane.f32.xlu0 %v242
  %v244 = vpop.xlane.xlu0 %243
  %v245 = vmul.f32 %v244, %v107
  %v246 = vadd.f32 %v245, 1e-05
  %v247 = vrsqrt.pop %v246
  %v248 = vmul.f32 %v241, %v247
  %v249 = vlaneseq
  %v250 = vshrl.u32 %v249, 7
  %v251 = vsub.s32 1, %v250
  %v252 = vrot.slane %v143, %v251
  %v253 = vmul.f32 %v248, %v252
  %v254 = vlaneseq
  %v255 = vshrl.u32 %v254, 7
  %v256 = vsub.s32 2, %v255
  %v257 = vrot.slane %v143, %v256
  %v258 = vadd.f32 %v253, %v257
  %v259 = vld [vmem:[%s3] sm:$0xf]
  %v260 = vld [vmem:[%s3 + $0x4] sm:$0xf]
  %v261 = vld [vmem:[%s3 + $0x8] sm:$0xf]
  %v262 = vld [vmem:[%s3 + $0xc] sm:$0xf]
  %v263 = vld [vmem:[%s3 + $0x10] sm:$0xf]
  %v264 = vld [vmem:[%s3 + $0x14] sm:$0xf]
  %v265 = vld [vmem:[%s3 + $0x18] sm:$0xf]
  %v266 = vld [vmem:[%s3 + $0x1c] sm:$0xf]
  %v267 = vld [vmem:[%s3 + $0x20] sm:$0xf]
  %v268 = vld [vmem:[%s3 + $0x24] sm:$0xf]
  %v269 = vld [vmem:[%s3 + $0x28] sm:$0xf]
  %v270 = vld [vmem:[%s3 + $0x2c] sm:$0xf]
  %v271 = vld [vmem:[%s3 + $0x30] sm:$0xf]
  %v272 = vld [vmem:[%s3 + $0x34] sm:$0xf]
  %v273 = vld [vmem:[%s3 + $0x38] sm:$0xf]
  %v274 = vld [vmem:[%s3 + $0x3c] sm:$0xf]
  %v275 = vpack.c.bf16 %v258, %v258
  %v276 = vlaneseq
  %v277 = vshrl.u32 %v276, 7
  %v278 = vsub.s32 0, %v277
  %v279 = vrot.slane %v46, %v278
  %v296 = vunpack.c.l.b16 %v259
  %v297 = vunpack.c.l.b16 %v260
  %v298 = vunpack.c.l.b16 %v261
  %v299 = vunpack.c.l.b16 %v262
  %v300 = vunpack.c.l.b16 %v263
  %v301 = vunpack.c.l.b16 %v264
  %v302 = vunpack.c.l.b16 %v265
  %v303 = vunpack.c.l.b16 %v266
  %v304 = vunpack.c.l.b16 %v267
  %v305 = vunpack.c.l.b16 %v268
  %v306 = vunpack.c.l.b16 %v269
  %v307 = vunpack.c.l.b16 %v270
  %v308 = vunpack.c.l.b16 %v271
  %v309 = vunpack.c.l.b16 %v272
  %v310 = vunpack.c.l.b16 %v273
  %v311 = vunpack.c.l.b16 %v274
  %v312 = vpack.c.b16 %v297, %v296
  %v313 = vpack.c.b16 %v299, %v298
  %v314 = vpack.c.b16 %v301, %v300
  %v315 = vpack.c.b16 %v303, %v302
  %v316 = vpack.c.b16 %v305, %v304
  %v317 = vpack.c.b16 %v307, %v306
  %v318 = vpack.c.b16 %v309, %v308
  %v319 = vpack.c.b16 %v311, %v310
  %328 = vmatprep.subr.bf16.mxu0 0
  %329 = vmatpush1.bf16.msra.mxu0 %v319
  %330 = vmatprep.subr.bf16.mxu0 0
  %331 = vmatpush1.bf16.msra.mxu0 %v318
  %332 = vmatprep.subr.bf16.mxu0 0
  %333 = vmatpush1.bf16.msra.mxu0 %v317
  %334 = vmatprep.subr.bf16.mxu0 0
  %335 = vmatpush1.bf16.msra.mxu0 %v316
  %336 = vmatprep.subr.bf16.mxu0 0
  %337 = vmatpush1.bf16.msra.mxu0 %v315
  %338 = vmatprep.subr.bf16.mxu0 0
  %339 = vmatpush1.bf16.msra.mxu0 %v314
  %340 = vmatprep.subr.bf16.mxu0 0
  %341 = vmatpush1.bf16.msra.mxu0 %v313
  %342 = vmatprep.subr.bf16.mxu0 0
  %343 = vmatpush1.bf16.msra.mxu0 %v312
  %344 = vmatprep.subr.bf16.mxu0 0
  %345 = vmatpush2.bf16.msra.mxu0 0
  %346 = vmatprep.subr.bf16.mxu0 0
  %347 = vmatpush2.bf16.msra.mxu0 0
  %348 = vmatprep.subr.bf16.mxu0 0
  %349 = vmatpush2.bf16.msra.mxu0 0
  %350 = vmatprep.subr.bf16.mxu0 0
  %351 = vmatpush2.bf16.msra.mxu0 0
  %352 = vmatprep.subr.bf16.mxu0 0
  %353 = vmatpush2.bf16.msra.mxu0 0
  %354 = vmatprep.subr.bf16.mxu0 0
  %355 = vmatpush2.bf16.msra.mxu0 0
  %356 = vmatprep.subr.bf16.mxu0 0
  %357 = vmatpush2.bf16.msra.mxu0 0
  %358 = vmatprep.subr.bf16.mxu0 0
  %359 = vmatpush2.bf16.msra.mxu0 0
  %360 = vmatprep.mubr.bf16.mxu0 0
  %361 = vmatmul.mubr.bf16.gmra.mxu0 %v275
  %v362 = vpop.f32.mrf.mxu0
  %v363 = vadd.f32 %v279, %v362
  %v364 = vpop.f32.mrf.mxu0
  %v365 = vpop.f32.mrf.mxu0
  %v366 = vpop.f32.mrf.mxu0
  %367 = vdwg.mxu0
  %v368 = vmax.f32 %v363, 0.0
  %vm369 = vcmask 523264
  %v370 = vsel %vm369, %v368, 0.0
  %371 = vadd.xlane.f32.xlu0 %v370
  %v372 = vpop.xlane.xlu0 %371
  %v373 = vrcp.pop 64.0
  %v374 = vmul.f32 %v372, %v373
  %v375 = vsub.f32 %v368, %v374
  %v376 = vmul.f32 %v375, %v375
  %v377 = vsel %vm369, %v376, 0.0
  %378 = vadd.xlane.f32.xlu0 %v377
  %v379 = vpop.xlane.xlu0 %378
  %v380 = vmul.f32 %v379, %v373
  %v381 = vadd.f32 %v380, 1e-05
  %v382 = vrsqrt.pop %v381
  %v383 = vmul.f32 %v375, %v382
  %v384 = vlaneseq
  %v385 = vshrl.u32 %v384, 7
  %v386 = vsub.s32 1, %v385
  %v387 = vrot.slane %v46, %v386
  %v388 = vmul.f32 %v383, %v387
  %v389 = vlaneseq
  %v390 = vshrl.u32 %v389, 7
  %v391 = vsub.s32 2, %v390
  %v392 = vrot.slane %v46, %v391
  %v393 = vadd.f32 %v388, %v392
  %v394 = vlaneseq
  %v395 = vshrl.u32 %v394, 7
  %v396 = vsub.s32 3, %v395
  %v397 = vrot.slane %v46, %v396
  %v398 = vmul.f32 %v393, %v397
  %v399 = vsel %vm369, %v398, 0.0
  %400 = vadd.xlane.f32.xlu0 %v399
  %v401 = vpop.xlane.xlu0 %400
  %403 = vset.pattern.permute.xlu0 0
  %404 = vperm.xlu0 %403, %v46
  %v405 = vpop.permute.xlu0 %404
  %v406 = vlaneseq
  %v407 = vshrl.u32 %v406, 7
  %v408 = vsub.s32 4, %v407
  %v409 = vrot.slane %v405, %v408
  %v411 = vadd.f32 %v401, %v409
  %v412 = vld [vmem:[%s12] sm:$0x1f]
  %v413 = vld [vmem:[%s7] sm:$0xf]
  %v414 = vld [vmem:[%s7 + $0x4] sm:$0xf]
  %v415 = vld [vmem:[%s10] sm:$0x7]
  %v416 = vlaneseq
  %v417 = vshrl.u32 %v416, 7
  %v418 = vsub.s32 0, %v417
  %v419 = vrot.slane %v415, %v418
  %v422 = vunpack.c.l.b16 %v413
  %v423 = vunpack.c.l.b16 %v414
  %v424 = vpack.c.b16 %v423, %v422
  %426 = vmatprep.subr.bf16.mxu0 0
  %427 = vmatpush1.bf16.msra.mxu0 0
  %428 = vmatprep.subr.bf16.mxu0 0
  %429 = vmatpush1.bf16.msra.mxu0 0
  %430 = vmatprep.subr.bf16.mxu0 0
  %431 = vmatpush1.bf16.msra.mxu0 0
  %432 = vmatprep.subr.bf16.mxu0 0
  %433 = vmatpush1.bf16.msra.mxu0 0
  %434 = vmatprep.subr.bf16.mxu0 0
  %435 = vmatpush1.bf16.msra.mxu0 0
  %436 = vmatprep.subr.bf16.mxu0 0
  %437 = vmatpush1.bf16.msra.mxu0 0
  %438 = vmatprep.subr.bf16.mxu0 0
  %439 = vmatpush1.bf16.msra.mxu0 0
  %440 = vmatprep.subr.bf16.mxu0 0
  %441 = vmatpush1.bf16.msra.mxu0 %v424
  %442 = vmatprep.subr.bf16.mxu0 0
  %443 = vmatpush2.bf16.msra.mxu0 0
  %444 = vmatprep.subr.bf16.mxu0 0
  %445 = vmatpush2.bf16.msra.mxu0 0
  %446 = vmatprep.subr.bf16.mxu0 0
  %447 = vmatpush2.bf16.msra.mxu0 0
  %448 = vmatprep.subr.bf16.mxu0 0
  %449 = vmatpush2.bf16.msra.mxu0 0
  %450 = vmatprep.subr.bf16.mxu0 0
  %451 = vmatpush2.bf16.msra.mxu0 0
  %452 = vmatprep.subr.bf16.mxu0 0
  %453 = vmatpush2.bf16.msra.mxu0 0
  %454 = vmatprep.subr.bf16.mxu0 0
  %455 = vmatpush2.bf16.msra.mxu0 0
  %456 = vmatprep.subr.bf16.mxu0 0
  %457 = vmatpush2.bf16.msra.mxu0 0
  %458 = vmatprep.mubr.bf16.mxu0 0
  %459 = vmatmul.mubr.bf16.gmra.mxu0 %v62
  %v460 = vpop.f32.mrf.mxu0
  %v461 = vadd.f32 %v419, %v460
  %v462 = vpop.f32.mrf.mxu0
  %v463 = vpop.f32.mrf.mxu0
  %v464 = vpop.f32.mrf.mxu0
  %465 = vdwg.mxu0
  %v466 = vmax.f32 %v461, 0.0
  %467 = vadd.xlane.f32.xlu0 %v466
  %v468 = vpop.xlane.xlu0 %467
  %v469 = vmul.f32 %v468, %v107
  %v470 = vsub.f32 %v466, %v469
  %v471 = vmul.f32 %v470, %v470
  %472 = vadd.xlane.f32.xlu0 %v471
  %v473 = vpop.xlane.xlu0 %472
  %v474 = vmul.f32 %v473, %v107
  %v475 = vadd.f32 %v474, 1e-05
  %v476 = vrsqrt.pop %v475
  %v477 = vmul.f32 %v470, %v476
  %v478 = vlaneseq
  %v479 = vshrl.u32 %v478, 7
  %v480 = vsub.s32 1, %v479
  %v481 = vrot.slane %v415, %v480
  %v482 = vmul.f32 %v477, %v481
  %v483 = vlaneseq
  %v484 = vshrl.u32 %v483, 7
  %v485 = vsub.s32 2, %v484
  %v486 = vrot.slane %v415, %v485
  %v487 = vadd.f32 %v482, %v486
  %v488 = vld [vmem:[%s8] sm:$0xf]
  %v489 = vld [vmem:[%s8 + $0x4] sm:$0xf]
  %v490 = vld [vmem:[%s8 + $0x8] sm:$0xf]
  %v491 = vld [vmem:[%s8 + $0xc] sm:$0xf]
  %v492 = vld [vmem:[%s8 + $0x10] sm:$0xf]
  %v493 = vld [vmem:[%s8 + $0x14] sm:$0xf]
  %v494 = vld [vmem:[%s8 + $0x18] sm:$0xf]
  %v495 = vld [vmem:[%s8 + $0x1c] sm:$0xf]
  %v496 = vld [vmem:[%s8 + $0x20] sm:$0xf]
  %v497 = vld [vmem:[%s8 + $0x24] sm:$0xf]
  %v498 = vld [vmem:[%s8 + $0x28] sm:$0xf]
  %v499 = vld [vmem:[%s8 + $0x2c] sm:$0xf]
  %v500 = vld [vmem:[%s8 + $0x30] sm:$0xf]
  %v501 = vld [vmem:[%s8 + $0x34] sm:$0xf]
  %v502 = vld [vmem:[%s8 + $0x38] sm:$0xf]
  %v503 = vld [vmem:[%s8 + $0x3c] sm:$0xf]
  %v504 = vld [vmem:[%s11] sm:$0x7]
  %v505 = vpack.c.bf16 %v487, %v487
  %v506 = vlaneseq
  %v507 = vshrl.u32 %v506, 7
  %v508 = vsub.s32 0, %v507
  %v509 = vrot.slane %v504, %v508
  %v526 = vunpack.c.l.b16 %v488
  %v527 = vunpack.c.l.b16 %v489
  %v528 = vunpack.c.l.b16 %v490
  %v529 = vunpack.c.l.b16 %v491
  %v530 = vunpack.c.l.b16 %v492
  %v531 = vunpack.c.l.b16 %v493
  %v532 = vunpack.c.l.b16 %v494
  %v533 = vunpack.c.l.b16 %v495
  %v534 = vunpack.c.l.b16 %v496
  %v535 = vunpack.c.l.b16 %v497
  %v536 = vunpack.c.l.b16 %v498
  %v537 = vunpack.c.l.b16 %v499
  %v538 = vunpack.c.l.b16 %v500
  %v539 = vunpack.c.l.b16 %v501
  %v540 = vunpack.c.l.b16 %v502
  %v541 = vunpack.c.l.b16 %v503
  %v542 = vpack.c.b16 %v527, %v526
  %v543 = vpack.c.b16 %v529, %v528
  %v544 = vpack.c.b16 %v531, %v530
  %v545 = vpack.c.b16 %v533, %v532
  %v546 = vpack.c.b16 %v535, %v534
  %v547 = vpack.c.b16 %v537, %v536
  %v548 = vpack.c.b16 %v539, %v538
  %v549 = vpack.c.b16 %v541, %v540
  %558 = vmatprep.subr.bf16.mxu0 0
  %559 = vmatpush1.bf16.msra.mxu0 %v549
  %560 = vmatprep.subr.bf16.mxu0 0
  %561 = vmatpush1.bf16.msra.mxu0 %v548
  %562 = vmatprep.subr.bf16.mxu0 0
  %563 = vmatpush1.bf16.msra.mxu0 %v547
  %564 = vmatprep.subr.bf16.mxu0 0
  %565 = vmatpush1.bf16.msra.mxu0 %v546
  %566 = vmatprep.subr.bf16.mxu0 0
  %567 = vmatpush1.bf16.msra.mxu0 %v545
  %568 = vmatprep.subr.bf16.mxu0 0
  %569 = vmatpush1.bf16.msra.mxu0 %v544
  %570 = vmatprep.subr.bf16.mxu0 0
  %571 = vmatpush1.bf16.msra.mxu0 %v543
  %572 = vmatprep.subr.bf16.mxu0 0
  %573 = vmatpush1.bf16.msra.mxu0 %v542
  %574 = vmatprep.subr.bf16.mxu0 0
  %575 = vmatpush2.bf16.msra.mxu0 0
  %576 = vmatprep.subr.bf16.mxu0 0
  %577 = vmatpush2.bf16.msra.mxu0 0
  %578 = vmatprep.subr.bf16.mxu0 0
  %579 = vmatpush2.bf16.msra.mxu0 0
  %580 = vmatprep.subr.bf16.mxu0 0
  %581 = vmatpush2.bf16.msra.mxu0 0
  %582 = vmatprep.subr.bf16.mxu0 0
  %583 = vmatpush2.bf16.msra.mxu0 0
  %584 = vmatprep.subr.bf16.mxu0 0
  %585 = vmatpush2.bf16.msra.mxu0 0
  %586 = vmatprep.subr.bf16.mxu0 0
  %587 = vmatpush2.bf16.msra.mxu0 0
  %588 = vmatprep.subr.bf16.mxu0 0
  %589 = vmatpush2.bf16.msra.mxu0 0
  %590 = vmatprep.mubr.bf16.mxu0 0
  %591 = vmatmul.mubr.bf16.gmra.mxu0 %v505
  %v592 = vpop.f32.mrf.mxu0
  %v593 = vadd.f32 %v509, %v592
  %v594 = vpop.f32.mrf.mxu0
  %v595 = vpop.f32.mrf.mxu0
  %v596 = vpop.f32.mrf.mxu0
  %597 = vdwg.mxu0
  %v598 = vmax.f32 %v593, 0.0
  %599 = vadd.xlane.f32.xlu0 %v598
  %v600 = vpop.xlane.xlu0 %599
  %v601 = vmul.f32 %v600, %v107
  %v602 = vsub.f32 %v598, %v601
  %v603 = vmul.f32 %v602, %v602
  %604 = vadd.xlane.f32.xlu0 %v603
  %v605 = vpop.xlane.xlu0 %604
  %v606 = vmul.f32 %v605, %v107
  %v607 = vadd.f32 %v606, 1e-05
  %v608 = vrsqrt.pop %v607
  %v609 = vmul.f32 %v602, %v608
  %v610 = vlaneseq
  %v611 = vshrl.u32 %v610, 7
  %v612 = vsub.s32 1, %v611
  %v613 = vrot.slane %v504, %v612
  %v614 = vmul.f32 %v609, %v613
  %v615 = vlaneseq
  %v616 = vshrl.u32 %v615, 7
  %v617 = vsub.s32 2, %v616
  %v618 = vrot.slane %v504, %v617
  %v619 = vadd.f32 %v614, %v618
  %v620 = vld [vmem:[%s9] sm:$0xf]
  %v621 = vld [vmem:[%s9 + $0x4] sm:$0xf]
  %v622 = vld [vmem:[%s9 + $0x8] sm:$0xf]
  %v623 = vld [vmem:[%s9 + $0xc] sm:$0xf]
  %v624 = vld [vmem:[%s9 + $0x10] sm:$0xf]
  %v625 = vld [vmem:[%s9 + $0x14] sm:$0xf]
  %v626 = vld [vmem:[%s9 + $0x18] sm:$0xf]
  %v627 = vld [vmem:[%s9 + $0x1c] sm:$0xf]
  %v628 = vld [vmem:[%s9 + $0x20] sm:$0xf]
  %v629 = vld [vmem:[%s9 + $0x24] sm:$0xf]
  %v630 = vld [vmem:[%s9 + $0x28] sm:$0xf]
  %v631 = vld [vmem:[%s9 + $0x2c] sm:$0xf]
  %v632 = vld [vmem:[%s9 + $0x30] sm:$0xf]
  %v633 = vld [vmem:[%s9 + $0x34] sm:$0xf]
  %v634 = vld [vmem:[%s9 + $0x38] sm:$0xf]
  %v635 = vld [vmem:[%s9 + $0x3c] sm:$0xf]
  %v636 = vpack.c.bf16 %v619, %v619
  %v637 = vlaneseq
  %v638 = vshrl.u32 %v637, 7
  %v639 = vsub.s32 0, %v638
  %v640 = vrot.slane %v412, %v639
  %v657 = vunpack.c.l.b16 %v620
  %v658 = vunpack.c.l.b16 %v621
  %v659 = vunpack.c.l.b16 %v622
  %v660 = vunpack.c.l.b16 %v623
  %v661 = vunpack.c.l.b16 %v624
  %v662 = vunpack.c.l.b16 %v625
  %v663 = vunpack.c.l.b16 %v626
  %v664 = vunpack.c.l.b16 %v627
  %v665 = vunpack.c.l.b16 %v628
  %v666 = vunpack.c.l.b16 %v629
  %v667 = vunpack.c.l.b16 %v630
  %v668 = vunpack.c.l.b16 %v631
  %v669 = vunpack.c.l.b16 %v632
  %v670 = vunpack.c.l.b16 %v633
  %v671 = vunpack.c.l.b16 %v634
  %v672 = vunpack.c.l.b16 %v635
  %v673 = vpack.c.b16 %v658, %v657
  %v674 = vpack.c.b16 %v660, %v659
  %v675 = vpack.c.b16 %v662, %v661
  %v676 = vpack.c.b16 %v664, %v663
  %v677 = vpack.c.b16 %v666, %v665
  %v678 = vpack.c.b16 %v668, %v667
  %v679 = vpack.c.b16 %v670, %v669
  %v680 = vpack.c.b16 %v672, %v671
  %689 = vmatprep.subr.bf16.mxu0 0
  %690 = vmatpush1.bf16.msra.mxu0 %v680
  %691 = vmatprep.subr.bf16.mxu0 0
  %692 = vmatpush1.bf16.msra.mxu0 %v679
  %693 = vmatprep.subr.bf16.mxu0 0
  %694 = vmatpush1.bf16.msra.mxu0 %v678
  %695 = vmatprep.subr.bf16.mxu0 0
  %696 = vmatpush1.bf16.msra.mxu0 %v677
  %697 = vmatprep.subr.bf16.mxu0 0
  %698 = vmatpush1.bf16.msra.mxu0 %v676
  %699 = vmatprep.subr.bf16.mxu0 0
  %700 = vmatpush1.bf16.msra.mxu0 %v675
  %701 = vmatprep.subr.bf16.mxu0 0
  %702 = vmatpush1.bf16.msra.mxu0 %v674
  %703 = vmatprep.subr.bf16.mxu0 0
  %704 = vmatpush1.bf16.msra.mxu0 %v673
  %705 = vmatprep.subr.bf16.mxu0 0
  %706 = vmatpush2.bf16.msra.mxu0 0
  %707 = vmatprep.subr.bf16.mxu0 0
  %708 = vmatpush2.bf16.msra.mxu0 0
  %709 = vmatprep.subr.bf16.mxu0 0
  %710 = vmatpush2.bf16.msra.mxu0 0
  %711 = vmatprep.subr.bf16.mxu0 0
  %712 = vmatpush2.bf16.msra.mxu0 0
  %713 = vmatprep.subr.bf16.mxu0 0
  %714 = vmatpush2.bf16.msra.mxu0 0
  %715 = vmatprep.subr.bf16.mxu0 0
  %716 = vmatpush2.bf16.msra.mxu0 0
  %717 = vmatprep.subr.bf16.mxu0 0
  %718 = vmatpush2.bf16.msra.mxu0 0
  %719 = vmatprep.subr.bf16.mxu0 0
  %720 = vmatpush2.bf16.msra.mxu0 0
  %721 = vmatprep.mubr.bf16.mxu0 0
  %722 = vmatmul.mubr.bf16.gmra.mxu0 %v636
  %v723 = vpop.f32.mrf.mxu0
  %v724 = vadd.f32 %v640, %v723
  %v725 = vpop.f32.mrf.mxu0
  %v726 = vpop.f32.mrf.mxu0
  %v727 = vpop.f32.mrf.mxu0
  %728 = vdwg.mxu0
  %v729 = vmax.f32 %v724, 0.0
  %v730 = vsel %vm369, %v729, 0.0
  %731 = vadd.xlane.f32.xlu0 %v730
  %v732 = vpop.xlane.xlu0 %731
  %v733 = vmul.f32 %v732, %v373
  %v734 = vsub.f32 %v729, %v733
  %v735 = vmul.f32 %v734, %v734
  %v736 = vsel %vm369, %v735, 0.0
  %737 = vadd.xlane.f32.xlu0 %v736
  %v738 = vpop.xlane.xlu0 %737
  %v739 = vmul.f32 %v738, %v373
  %v740 = vadd.f32 %v739, 1e-05
  %v741 = vrsqrt.pop %v740
  %v742 = vmul.f32 %v734, %v741
  %v743 = vlaneseq
  %v744 = vshrl.u32 %v743, 7
  %v745 = vsub.s32 1, %v744
  %v746 = vrot.slane %v412, %v745
  %v747 = vmul.f32 %v742, %v746
  %v748 = vlaneseq
  %v749 = vshrl.u32 %v748, 7
  %v750 = vsub.s32 2, %v749
  %v751 = vrot.slane %v412, %v750
  %v752 = vadd.f32 %v747, %v751
  %v753 = vlaneseq
  %v754 = vshrl.u32 %v753, 7
  %v755 = vsub.s32 3, %v754
  %v756 = vrot.slane %v412, %v755
  %v757 = vmul.f32 %v752, %v756
  %v758 = vsel %vm369, %v757, 0.0
  %759 = vadd.xlane.f32.xlu0 %v758
  %v760 = vpop.xlane.xlu0 %759
  %762 = vset.pattern.permute.xlu0 0
  %763 = vperm.xlu0 %762, %v412
  %v764 = vpop.permute.xlu0 %763
  %v765 = vlaneseq
  %v766 = vshrl.u32 %v765, 7
  %v767 = vsub.s32 4, %v766
  %v768 = vrot.slane %v764, %v767
  %v770 = vadd.f32 %v760, %v768
  %772 = vset.pattern.permute.xlu0 0
  %773 = vperm.xlu0 %772, %v411
  %v774 = vpop.permute.xlu0 %773
  %v775 = vlaneseq
  %v776 = vand.u32 %v775, 127
  %v777 = vlaneseq
  %v778 = vshrl.u32 %v777, 7
  %v779 = vsub.s32 %v776, %v778
  %v780 = vrot.slane %v774, %v779
  %783 = vset.pattern.permute.xlu0 0
  %784 = vperm.xlu0 %783, %v770
  %v785 = vpop.permute.xlu0 %784
  %v786 = vlaneseq
  %v787 = vshrl.u32 %v786, 7
  %v788 = vsub.s32 %v776, %v787
  %v789 = vrot.slane %v785, %v788
  %vm791 = vcmask 1040384
  %v792 = vsel %vm791, %v780, %v789
  %vm793 = vcmask 58368
  %794 = vst.msk [vmem:[%s13] sm:$0x3] %vm793, %v792
  // Predicated region
  $region54: #{_critic_forward.1} parent=0 // pred_check
    _
  $region55: #{_critic_forward.1} parent=0 // pred_check_branch
    %796 = sbr.rel (0) target = $region57
  $region56: #{_critic_forward.1} parent=0 // pred_region
    _
  $region57: #{_critic_forward.1} parent=0 // pred_fallthru
    _
  // Predicated region
  $region58: #{_critic_forward.1} parent=0 // pred_check
    _
  $region59: #{_critic_forward.1} parent=0 // pred_check_branch
    %798 = sbr.rel (0) target = $region61
  $region60: #{_critic_forward.1} parent=0 // pred_region
    _
  $region61: #{_critic_forward.1} parent=0 // pred_fallthru
    _

</llo_original>
